<compile_context>
chip_gen: v7x
topology: tpu7x:2x2x1
jax: 0.10.0
libtpu: 0.0.40
codegen_flags: <defaults>
</compile_context>

<pallas_src>
import jax
import jax.numpy as jnp
from jax.experimental import pallas as pl
from jax.experimental.pallas import tpu as pltpu


_SMALL_TABLE_BYTES = 1 << 20   # below this, the dense MXU gather wins
_ONEHOT_TILE = 2048            # lane-dense one-hot output tile (multiple of 128)


# ---------------------------------------------------------------------------
# Kernels
# ---------------------------------------------------------------------------

def _onehot_kernel(ids_ref, out_ref):
    # ids_ref: (B, 1) int32 VMEM; out_ref: (B, TS) f32 tile of the (B, S) output.
    ts = out_ref.shape[1]
    col0 = pl.program_id(0) * ts                                    # tile offset in S
    ids = ids_ref[...]                                              # (B, 1)
    iota = col0 + jax.lax.broadcasted_iota(jnp.int32, out_ref.shape, 1)
    out_ref[...] = (ids == iota).astype(jnp.float32)


def _embedding_matmul_kernel(ids_ref, table_ref, out_ref):
    # Small-table path: one-hot row-select as a dense MXU matmul (exact).
    # ids_ref: (B, 1) int32, table_ref: (S, D) f32, out_ref: (B, D) f32.
    ids = ids_ref[...]                                              # (B, 1)
    num_speakers = table_ref.shape[0]
    iota = jax.lax.broadcasted_iota(
        jnp.int32, (ids.shape[0], num_speakers), 1)                 # (B, S)
    onehot = (ids == iota).astype(jnp.float32)                      # (B, S)
    out_ref[...] = jnp.dot(onehot, table_ref[...],
                           preferred_element_type=jnp.float32)


def _embedding_gather_kernel(ids_ref, table_hbm, out_ref, copy_sems):
    # Large-table path: explicit per-row DMA gather, table stays in HBM.
    # ids_ref:   (B,) int32 in SMEM (scalar prefetch)
    # table_hbm: (S, D) f32 ref in HBM (memory_space=pl.ANY)
    # out_ref:   (B, D) f32 in VMEM
    # copy_sems: (B,) DMA semaphores
    batch = out_ref.shape[0]

    def _issue(b, carry):
        idx = ids_ref[b]
        pltpu.make_async_copy(table_hbm.at[idx], out_ref.at[b],
                              copy_sems.at[b]).start()
        return carry

    jax.lax.fori_loop(0, batch, _issue, 0)   # all B row-DMAs in flight at once

    def _wait(b, carry):
        pltpu.make_async_copy(table_hbm.at[0], out_ref.at[b],
                              copy_sems.at[b]).wait()
        return carry

    jax.lax.fori_loop(0, batch, _wait, 0)


# ---------------------------------------------------------------------------
# pallas_call wrappers
# ---------------------------------------------------------------------------

def _one_hot_forward(ids, num_speakers):
    b = ids.shape[0]
    ts = num_speakers if num_speakers <= _ONEHOT_TILE else _ONEHOT_TILE
    grid = (pl.cdiv(num_speakers, ts),)
    return pl.pallas_call(
        _onehot_kernel,
        out_shape=jax.ShapeDtypeStruct((b, num_speakers), jnp.float32),
        grid=grid,
        in_specs=[pl.BlockSpec((b, 1), lambda j: (0, 0))],
        out_specs=pl.BlockSpec((b, ts), lambda j: (0, j)),
        compiler_params=pltpu.CompilerParams(
            dimension_semantics=("parallel",)),
    )(ids.reshape(b, 1))


def _embedding_matmul_forward(ids, table):
    b = ids.shape[0]
    d = table.shape[1]
    return pl.pallas_call(
        _embedding_matmul_kernel,
        out_shape=jax.ShapeDtypeStruct((b, d), jnp.float32),
        in_specs=[pl.BlockSpec(memory_space=pltpu.MemorySpace.VMEM),
                  pl.BlockSpec(memory_space=pltpu.MemorySpace.VMEM)],
        out_specs=pl.BlockSpec(memory_space=pltpu.MemorySpace.VMEM),
    )(ids.reshape(b, 1), table)


def _embedding_gather_forward(ids, table):
    b = ids.shape[0]
    s, d = table.shape
    # OOB speaker ids would be an OOB DMA source (HW fault); PyTorch nn.Embedding
    # would raise instead.  Clamp defensively (documented semantic difference).
    ids = jnp.clip(ids, 0, s - 1)
    grid_spec = pltpu.PrefetchScalarGridSpec(
        num_scalar_prefetch=1,                                # ids -> SMEM
        grid=(),
        in_specs=[pl.BlockSpec(memory_space=pl.ANY)],         # table stays in HBM
        out_specs=pl.BlockSpec(memory_space=pltpu.MemorySpace.VMEM),
        scratch_shapes=[pltpu.SemaphoreType.DMA((b,))],
    )
    return pl.pallas_call(
        _embedding_gather_kernel,
        out_shape=jax.ShapeDtypeStruct((b, d), jnp.float32),
        grid_spec=grid_spec,
    )(ids, table)


# ---------------------------------------------------------------------------
# Module
# ---------------------------------------------------------------------------

class SpeakerEmbedding:
    """JAX/Pallas re-implementation of the PyTorch SpeakerEmbedding module."""

    def __init__(self, num_speakers, embedding_size, using_onehot, *, key=None):
        self.using_onehot = bool(using_onehot)
        self.num_speakers = int(num_speakers)
        if not self.using_onehot:
            if key is None:
                key = jax.random.PRNGKey(0)
            # torch.nn.Embedding default init: N(0, 1)
            self.table = jax.random.normal(
                key, (num_speakers, embedding_size), dtype=jnp.float32)
            self.condition_size = int(embedding_size)
        else:
            self.table = None
            self.condition_size = int(num_speakers)

    def __call__(self, inputs, *, use_gather=None):
        assert inputs.ndim == 1
        ids = inputs.astype(jnp.int32)
        if self.using_onehot:
            return _one_hot_forward(ids, self.num_speakers)
        if use_gather is None:
            use_gather = (self.table.size * self.table.dtype.itemsize
                          > _SMALL_TABLE_BYTES)
        if use_gather:
            return _embedding_gather_forward(ids, self.table)
        return _embedding_matmul_forward(ids, self.table)


# ---------------------------------------------------------------------------
# Self-test
# ---------------------------------------------------------------------------

if __name__ == "__main__":
    key = jax.random.PRNGKey(0)
    k_ids, k_emb = jax.random.split(key)

    num_speakers = 16
    embedding_size = 32
    batch = 8

    speaker_ids = jax.random.randint(
        k_ids, (batch,), minval=0, maxval=num_speakers, dtype=jnp.int32)

    # --- embedding-lookup path (using_onehot=False) ---
    mod_emb = SpeakerEmbedding(num_speakers, embedding_size,
                               using_onehot=False, key=k_emb)
    ref_emb = mod_emb.table[speaker_ids]

    # small table -> auto-selected dense MXU path
    out_small = jax.block_until_ready(mod_emb(speaker_ids))
    assert out_small.shape == (batch, embedding_size)
    assert out_small.dtype == jnp.float32
    assert jnp.allclose(out_small, ref_emb, atol=1e-6)

    # explicit HBM DMA-gather path (what large tables auto-select)
    out_gather = jax.block_until_ready(mod_emb(speaker_ids, use_gather=True))
    assert out_gather.shape == (batch, embedding_size)
    assert out_gather.dtype == jnp.float32
    assert jnp.array_equal(out_gather, ref_emb)

    # --- one-hot path (using_onehot=True) ---
    mod_oh = SpeakerEmbedding(num_speakers, embedding_size, using_onehot=True)
    out_oh = jax.block_until_ready(mod_oh(speaker_ids))
    ref_oh = jax.nn.one_hot(speaker_ids, num_speakers, dtype=jnp.float32)
    assert out_oh.shape == (batch, num_speakers)
    assert out_oh.dtype == jnp.float32
    assert jnp.array_equal(out_oh, ref_oh)

    print("KERNEL_OK")
</pallas_src>

<mosaic_0001>
module attributes {stable_mosaic.version = 11 : i64} {
  func.func @_embedding_matmul_kernel(%arg0: memref<8x1xi32, #tpu.memory_space<vmem>>, %arg1: memref<16x32xf32, #tpu.memory_space<vmem>>, %arg2: memref<8x32xf32, #tpu.memory_space<vmem>>) attributes {dimension_semantics = [], scalar_prefetch = 0 : i64, scratch_operands = 0 : i64, tpu.core_type = #tpu.core_type<tc>} {
    %c0 = arith.constant 0 : index
    %c0_0 = arith.constant 0 : index
    %0 = vector.load %arg0[%c0, %c0_0] : memref<8x1xi32, #tpu.memory_space<vmem>>, vector<8x1xi32>
    %1 = tpu.iota {dimensions = array<i32: 1>} : vector<8x16xi32>
    %2 = vector.broadcast %0 : vector<8x1xi32> to vector<8x16xi32>
    %3 = arith.cmpi eq, %2, %1 : vector<8x16xi32>
    %4 = arith.extui %3 : vector<8x16xi1> to vector<8x16xi32>
    %5 = arith.sitofp %4 : vector<8x16xi32> to vector<8x16xf32>
    %c0_1 = arith.constant 0 : index
    %c0_2 = arith.constant 0 : index
    %6 = vector.load %arg1[%c0_1, %c0_2] : memref<16x32xf32, #tpu.memory_space<vmem>>, vector<16x32xf32>
    %cst = arith.constant dense<0.000000e+00> : vector<8x32xf32>
    %7 = tpu.matmul %5, %6, %cst {dimension_numbers = #tpu.dot_dimension_numbers<[1], [0], [0], [1], [0, 0, 1, 1], [], []>} : vector<8x16xf32>, vector<16x32xf32>, vector<8x32xf32> -> vector<8x32xf32>
    %c0_3 = arith.constant 0 : index
    %c0_4 = arith.constant 0 : index
    %8 = vector.load %arg2[%c0_3, %c0_4] : memref<8x32xf32, #tpu.memory_space<vmem>>, vector<8x32xf32>
    tpu.vector_store %arg2[%c0_3, %c0_4], %7 {strides = array<i32>} : memref<8x32xf32, #tpu.memory_space<vmem>>, vector<8x32xf32>,
    return
  }
}

</mosaic_0001>

<llo_original>
// kernel: tpu_custom_call.1
$region0: #{tpu_custom_call.1}
  #allocation0 [shape = 'u32[]', space=smem, size = 0x4, offset = 0x4, fixed_abs, tag = 'smem constant byte address 0x4 - core index']
  #allocation1 [shape = 'u32[144,128]{1,0:T(1,128)}', space=vmem, size = 0x12000, scoped, tag = 'internal scratch']
  %s0 = inlined_call_operand.vmem [shape: s32[8,1], index: 0, kind: input, shape index: {}]
  %s1 = inlined_call_operand.hbm [shape: f32[16,32], index: 1, kind: input, shape index: {}]
  %s2 = inlined_call_operand.hbm [shape: f32[8,32], index: 2, kind: output, shape index: {}]
  %s3 = sld [smem:[#allocation0]]
  $region22: #{tpu_custom_call.1} parent=0
    _
  %s5 = ssub.s32 1, %s3
  %s6 = scalar_select 0, %s5, %s3
  $region1: #{tpu_custom_call.1} parent=0
    #allocation2 [shape = 'u8[8192]{0}', space=vmem, size = 0x2000, scoped, tag = 'input window, operand 1, single buffered']
    #allocation3 [shape = 's32[1]{0}', space=sflag, size = 0x4, scoped, tag = 'scoped memory for tpu_custom_call.1']
    #allocation4 [shape = 's32[1]{0}', space=sflag, size = 0x4, scoped, tag = 'scoped memory for tpu_custom_call.1']
    #allocation5 [shape = 'u8[4096]{0}', space=vmem, size = 0x1000, scoped, tag = 'output window, operand 0, single buffered']
    %7 = vsyncpa [#allocation3], 0
    %8 = vsyncpa [#allocation4], 0
    // Predicated region
    $region2: #{tpu_custom_call.1} parent=1 // pred_check
      _
    $region3: #{tpu_custom_call.1} parent=1 // pred_check_branch
      %10 = sbr.rel (0) target = $region5
    $region4: #{tpu_custom_call.1} parent=1 // pred_region
      _
    $region5: #{tpu_custom_call.1} parent=1 // pred_fallthru
      _
    // Predicated region
    $region6: #{tpu_custom_call.1} parent=1 // pred_check
      _
    $region7: #{tpu_custom_call.1} parent=1 // pred_check_branch
      %12 = sbr.rel (0) target = $region9
    $region8: #{tpu_custom_call.1} parent=1 // pred_region
      %s14 = ssub.s32 256, 256
      %15 = vsyncadd [#allocation3], %s14
      %s16 = sshll.u32 [#allocation2], 4
      %s17 = int_to_ptr.vmem [resolvable:$true] %s16
      %22 = dma.hbm_to_vmem [thread:$0]  %s1, 256, %s17, [#allocation3], 128, 128, 8
    $region9: #{tpu_custom_call.1} parent=1 // pred_fallthru
      _
    // Predicated region
    $region10: #{tpu_custom_call.1} parent=1 // pred_check
      _
    $region11: #{tpu_custom_call.1} parent=1 // pred_check_branch
      %24 = sbr.rel (0) target = $region13
    $region12: #{tpu_custom_call.1} parent=1 // pred_region
      %25 = dma.done [#allocation3], 256
    $region13: #{tpu_custom_call.1} parent=1 // pred_fallthru
      _
    %v26 = vld [vmem:[%s0] sm:$0xff]
    %v27 = vlaneseq
    %v28 = vand.u32 %v27, 127
    %29 = vset.pattern.permute.xlu0 0
    %30 = vperm.xlu0 %29, %v26
    %v31 = vpop.permute.xlu0 %30
    %vm32 = vcmp.eq.s32.totalorder %v31, %v28
    %v33 = vsel %vm32, 1, 0
    %v34 = vcvt.s32.f32 %v33
    %v35 = vld [vmem:[#allocation2] sm:$0xff]
    %v36 = vld [vmem:[#allocation2 + $0x8] sm:$0xff]
    %vm37 = vcmask 130048
    %v39 = vsel %vm37, %v34, 0
    %41 = vmatprep.subr.mxu0 0.0
    %42 = vmatpush1.msra.mxu0 %v35
    %43 = vmatprep.subr.mxu0 0.0
    %44 = vmatpush1.msra.mxu0 %v36
    %45 = vmatprep.subr.mxu0 0.0
    %46 = vmatpush1.msra.mxu0 0.0
    %47 = vmatprep.subr.mxu0 0.0
    %48 = vmatpush1.msra.mxu0 0.0
    %49 = vmatprep.subr.mxu0 0.0
    %50 = vmatpush1.msra.mxu0 0.0
    %51 = vmatprep.subr.mxu0 0.0
    %52 = vmatpush1.msra.mxu0 0.0
    %53 = vmatprep.subr.mxu0 0.0
    %54 = vmatpush1.msra.mxu0 0.0
    %55 = vmatprep.subr.mxu0 0.0
    %56 = vmatpush1.msra.mxu0 0.0
    %57 = vmatprep.subr.mxu0 0.0
    %58 = vmatpush1.msra.mxu0 0.0
    %59 = vmatprep.subr.mxu0 0.0
    %60 = vmatpush1.msra.mxu0 0.0
    %61 = vmatprep.subr.mxu0 0.0
    %62 = vmatpush1.msra.mxu0 0.0
    %63 = vmatprep.subr.mxu0 0.0
    %64 = vmatpush1.msra.mxu0 0.0
    %65 = vmatprep.subr.mxu0 0.0
    %66 = vmatpush1.msra.mxu0 0.0
    %67 = vmatprep.subr.mxu0 0.0
    %68 = vmatpush1.msra.mxu0 0.0
    %69 = vmatprep.subr.mxu0 0.0
    %70 = vmatpush1.msra.mxu0 0.0
    %71 = vmatprep.subr.mxu0 0.0
    %72 = vmatpush1.msra.mxu0 0.0
    %73 = vmatprep.subr.mxu0 0.0
    %74 = vmatpush1.msra.mxu0 0.0
    %75 = vmatprep.subr.mxu0 0.0
    %76 = vmatpush1.msra.mxu0 0.0
    %77 = vmatprep.subr.mxu0 0.0
    %78 = vmatpush1.msra.mxu0 0.0
    %79 = vmatprep.subr.mxu0 0.0
    %80 = vmatpush1.msra.mxu0 0.0
    %81 = vmatprep.subr.mxu0 0.0
    %82 = vmatpush1.msra.mxu0 0.0
    %83 = vmatprep.subr.mxu0 0.0
    %84 = vmatpush1.msra.mxu0 0.0
    %85 = vmatprep.subr.mxu0 0.0
    %86 = vmatpush1.msra.mxu0 0.0
    %87 = vmatprep.subr.mxu0 0.0
    %88 = vmatpush1.msra.mxu0 0.0
    %89 = vmatprep.subr.mxu0 0.0
    %90 = vmatpush1.msra.mxu0 0.0
    %91 = vmatprep.subr.mxu0 0.0
    %92 = vmatpush1.msra.mxu0 0.0
    %93 = vmatprep.subr.mxu0 0.0
    %94 = vmatpush1.msra.mxu0 0.0
    %95 = vmatprep.subr.mxu0 0.0
    %96 = vmatpush1.msra.mxu0 0.0
    %97 = vmatprep.subr.mxu0 0.0
    %98 = vmatpush1.msra.mxu0 0.0
    %99 = vmatprep.subr.mxu0 0.0
    %100 = vmatpush1.msra.mxu0 0.0
    %101 = vmatprep.subr.mxu0 0.0
    %102 = vmatpush1.msra.mxu0 0.0
    %103 = vmatprep.subr.mxu0 0.0
    %104 = vmatpush1.msra.mxu0 0.0
    %105 = vmatprep.mubr.f32.mxu0 0.0
    %106 = vmatmul.mubr.f32.gmra.mrb[0].mxu0 %v39
    %v107 = vpop.f32.mrb[0].mxu0
    %v108 = vadd.f32 0.0, %v107
    %v109 = vpop.f32.mrb[0].mxu0
    %110 = vdwg.mxu0
    %vm111 = vcmask 261120
    %112 = vst.msk [vmem:[#allocation5] sm:$0xff] %vm111, %v108
    // Predicated region
    $region14: #{tpu_custom_call.1} parent=1 // pred_check
      _
    $region15: #{tpu_custom_call.1} parent=1 // pred_check_branch
      %114 = sbr.rel (0) target = $region17
    $region16: #{tpu_custom_call.1} parent=1 // pred_region
      %s116 = ssub.s32 128, 128
      %117 = vsyncadd [#allocation4], %s116
      %s119 = sshll.u32 [#allocation5], 4
      %s120 = int_to_ptr.vmem [resolvable:$true] %s119
      %122 = dma.vmem_to_hbm [thread:$0]  %s120, 128, %s2, [#allocation4]
    $region17: #{tpu_custom_call.1} parent=1 // pred_fallthru
      _
    // Predicated region
    $region18: #{tpu_custom_call.1} parent=1 // pred_check
      _
    $region19: #{tpu_custom_call.1} parent=1 // pred_check_branch
      %124 = sbr.rel (0) target = $region21
    $region20: #{tpu_custom_call.1} parent=1 // pred_region
      %125 = dma.done [#allocation4], 128
    $region21: #{tpu_custom_call.1} parent=1 // pred_fallthru
      _
    %126 = vsyncpa [#allocation3], 1
    %127 = vsyncpa [#allocation4], 1

</llo_original>
